<compile_context>
chip_gen: v7x
topology: tpu7x:2x2x1
jax: 0.10.0
libtpu: 0.0.40
codegen_flags: <defaults>
</compile_context>

<pallas_src>
import functools

import numpy as np

import jax
import jax.numpy as jnp
from jax.experimental import pallas as pl
from jax.experimental.pallas import tpu as pltpu


# ----------------------------------------------------------------------------
# Interpolation / crop matrices (plain JAX, built once per static shape)
# ----------------------------------------------------------------------------
def _resized_output_size(h, w, size):
    # torchvision rule for size = [s]: resize the smaller edge to s.
    short, long = (w, h) if w <= h else (h, w)
    new_short = size
    new_long = int(size * long / short)
    new_w, new_h = (new_short, new_long) if w <= h else (new_long, new_short)
    return new_h, new_w


def _bilinear_matrix(out_size, in_size):
    # PyTorch bilinear, align_corners=False:
    #   src = (i + 0.5) * in/out - 0.5, clamped; weights (1 - frac, frac).
    i = jnp.arange(out_size, dtype=jnp.float32)
    x = (i + 0.5) * (in_size / out_size) - 0.5
    x = jnp.clip(x, 0.0, float(in_size - 1))
    x0 = jnp.floor(x)
    frac = x - x0
    x0i = x0.astype(jnp.int32)
    x1i = jnp.minimum(x0i + 1, in_size - 1)
    rows = jnp.arange(out_size)
    m = jnp.zeros((out_size, in_size), jnp.float32)
    m = m.at[rows, x0i].add(1.0 - frac)
    m = m.at[rows, x1i].add(frac)
    return m


def _crop_offset(full, crop):
    # torchvision center_crop offset; negative => zero padding (crop > image).
    if full >= crop:
        return int(round((full - crop) / 2.0))
    return -((crop - full) // 2)


def _crop_matrix(full_mat, crop, offset):
    # Select `crop` rows of the resize matrix starting at `offset`; rows that
    # fall outside the resized image are all-zero (center_crop zero padding).
    out_size = full_mat.shape[0]
    idx = offset + jnp.arange(crop)
    valid = (idx >= 0) & (idx < out_size)
    gathered = full_mat[jnp.clip(idx, 0, out_size - 1), :]
    return jnp.where(valid[:, None], gathered, 0.0)


# ----------------------------------------------------------------------------
# VMEM sizing
# ----------------------------------------------------------------------------
def _round_up(x, m):
    return (x + m - 1) // m * m


def _plane_bytes(rows, cols, itemsize):
    # Padded (sublane, lane) footprint of one 2-D plane in VMEM.
    sublane = {1: 32, 2: 16}.get(itemsize, 8)
    return _round_up(max(rows, 1), sublane) * _round_up(max(cols, 1), 128) * itemsize


def _vmem_limit_bytes():
    # v5e/v6e have 128 MiB VMEM -> raise the scoped limit; v7x only has 64 MiB
    # per TensorCore, so stay at the conservative 32 MiB (also the fallback).
    try:
        kind = jax.devices()[0].device_kind.lower()
    except Exception:
        kind = ""
    if "v7" in kind:
        return 32 * 1024 * 1024
    if "v5" in kind or "v6" in kind:
        return 64 * 1024 * 1024
    return 32 * 1024 * 1024


def _pick_batch_tile(n, c, h, w, in_itemsize, ch, cw, mm_itemsize, out_itemsize,
                     budget_bytes):
    """Largest batch tile whose pipelined blocks AND in-kernel temporaries fit."""
    in_plane = _plane_bytes(h, w, in_itemsize)
    out_plane = _plane_bytes(ch, cw, out_itemsize)
    interm = (2 * _plane_bytes(h, w, 4)              # u8->i32->f32 cast temps
              + _plane_bytes(h, w, mm_itemsize)      # image in matmul dtype
              + _plane_bytes(w, cw, mm_itemsize)     # rwt broadcast
              + _plane_bytes(h, cw, 4)               # y1 (f32 accumulator)
              + _plane_bytes(h, cw, mm_itemsize)     # y1 cast for 2nd matmul
              + _plane_bytes(ch, h, mm_itemsize)     # rh broadcast
              + _plane_bytes(ch, cw, 4))             # z (f32)
    per_image = c * (2 * in_plane + 2 * out_plane + interm)   # x2: double buffer
    fixed = 2 * (_plane_bytes(ch, h, mm_itemsize) + _plane_bytes(w, cw, mm_itemsize))
    avail = max(budget_bytes - fixed, per_image)
    bn = max(1, avail // max(per_image, 1))
    cap = 16
    if n > 1:
        cap = min(cap, pl.cdiv(n, 2))   # guarantee >= 2 grid steps (v7x dual TC)
    return int(max(1, min(bn, n, cap)))


# ----------------------------------------------------------------------------
# Kernel helpers
# ----------------------------------------------------------------------------
def _round_half_to_even(x):
    # Round-half-to-even from floor/cmp/select only (guaranteed VPU lowering);
    # matches torch.round / jnp.round tie behavior exactly.
    f = jnp.floor(x)
    diff = x - f
    half_f = f * 0.5
    is_odd = (half_f - jnp.floor(half_f)) != 0.0
    round_up = (diff > 0.5) | ((diff == 0.5) & is_odd)
    return f + round_up.astype(x.dtype)


# ----------------------------------------------------------------------------
# Pallas kernel: one (bn, C, H, W) block per grid step, two batched MXU ops
# ----------------------------------------------------------------------------
def _imagenet_eval_kernel(rh_ref, rwt_ref, mean_ref, inv_std_ref, img_ref, out_ref,
                          *, mm_dtype):
    bn, num_c, h, w = img_ref.shape
    ch, cw = out_ref.shape[2], out_ref.shape[3]
    nb = bn * num_c
    is_uint8 = img_ref.dtype == jnp.uint8

    x = img_ref[...]                                   # (bn, c, H, W), raw dtype
    if is_uint8:
        x = x.astype(jnp.int32)                        # widen u8 in VMEM
    x = x.astype(jnp.float32).astype(mm_dtype)
    x = x.reshape(nb, h, w)                            # free major-dim merge

    rh = rh_ref[...]                                   # (ch, H), mm dtype
    rwt = rwt_ref[...]                                 # (W, cw), mm dtype
    rwt_b = jnp.broadcast_to(rwt[None, :, :], (nb, w, cw))
    rh_b = jnp.broadcast_to(rh[None, :, :], (nb, ch, h))

    # W contraction over all bn*c planes in one batched MXU op.
    y1 = jnp.einsum("bhw,bwq->bhq", x, rwt_b,
                    preferred_element_type=jnp.float32)          # (nb, H, cw)
    # H contraction, also one batched MXU op.
    z = jnp.einsum("bph,bhq->bpq", rh_b, y1.astype(mm_dtype),
                   preferred_element_type=jnp.float32)           # (nb, ch, cw)
    z = z.reshape(bn, num_c, ch, cw)

    if is_uint8:
        # torchvision rounds the resize result back to uint8 before
        # convert_image_dtype; the /255 is folded into mean/inv_std.
        z = jnp.clip(_round_half_to_even(z), 0.0, 255.0)

    # Per-channel normalize (mean / 1/std are SMEM scalars); c is tiny (3).
    for ci in range(num_c):
        out_ref[:, ci, :, :] = ((z[:, ci, :, :] - mean_ref[ci])
                                * inv_std_ref[ci]).astype(out_ref.dtype)


# ----------------------------------------------------------------------------
# Wrapper
# ----------------------------------------------------------------------------
@functools.partial(jax.jit,
                   static_argnames=("crop_size", "resize_size", "mm_dtype", "out_dtype"))
def imagenet_eval(img, *, crop_size, resize_size=256,
                  mean=(0.485, 0.456, 0.406), std=(0.229, 0.224, 0.225),
                  mm_dtype=jnp.bfloat16, out_dtype=jnp.float32):
    n, c, h, w = img.shape
    if len(mean) != c or len(std) != c:
        raise ValueError("mean/std length must equal the channel count")

    if img.dtype == jnp.uint8:
        is_uint8 = True
    elif jnp.issubdtype(img.dtype, jnp.floating):
        is_uint8 = False
    else:
        raise ValueError(f"unsupported input dtype {img.dtype}")

    mm_np = np.dtype(mm_dtype)
    out_np = np.dtype(out_dtype)

    new_h, new_w = _resized_output_size(h, w, resize_size)
    ch = cw = crop_size
    top = _crop_offset(new_h, ch)
    left = _crop_offset(new_w, cw)

    # Interpolation matrices (crop / zero-pad folded in), built in MXU dtype.
    rh = _crop_matrix(_bilinear_matrix(new_h, h), ch, top).astype(mm_np)       # (ch, H)
    rwt = _crop_matrix(_bilinear_matrix(new_w, w), cw, left).T.astype(mm_np)   # (W, cw)

    mean_a = jnp.asarray(mean, jnp.float32)
    std_a = jnp.asarray(std, jnp.float32)
    if is_uint8:
        # convert_image_dtype's /255 folded into normalize:
        #   (r/255 - m)/s == (r - 255 m) * (1 / (255 s))
        mean_s = mean_a * 255.0
        inv_std_s = 1.0 / (std_a * 255.0)
    else:
        mean_s = mean_a
        inv_std_s = 1.0 / std_a
    # TODO(synk): for float inputs the normalize could be folded into per-channel
    #             rh matrices (reviewer opt); kept as one cheap VPU pass so the
    #             uint8 path (rounding between resize and normalize) shares code.

    vmem_limit = _vmem_limit_bytes()
    bn = _pick_batch_tile(n, c, h, w, img.dtype.itemsize, ch, cw,
                          mm_np.itemsize, out_np.itemsize,
                          budget_bytes=vmem_limit - 4 * 1024 * 1024)
    grid = (pl.cdiv(n, bn),)   # ragged last block is masked on writeback

    flops = 2 * n * c * ch * cw * (w * h // max(ch, 1) + h)  # ~ 2*H*cw*(W+ch) per plane
    flops = 2 * n * c * (h * cw * w + ch * cw * h) + 6 * n * c * ch * cw
    bytes_accessed = (n * c * h * w * img.dtype.itemsize       # image in
                      + n * c * ch * cw * out_np.itemsize      # result out
                      + (ch * h + w * cw) * mm_np.itemsize     # interp matrices
                      + 2 * c * 4)                             # mean / inv_std

    kernel = functools.partial(_imagenet_eval_kernel, mm_dtype=mm_np)

    out = pl.pallas_call(
        kernel,
        out_shape=jax.ShapeDtypeStruct((n, c, ch, cw), out_np),
        grid=grid,
        in_specs=[
            pl.BlockSpec((ch, h), lambda i: (0, 0)),               # rh   (constant -> DMA'd once)
            pl.BlockSpec((w, cw), lambda i: (0, 0)),               # rw^T (constant -> DMA'd once)
            pl.BlockSpec(memory_space=pltpu.MemorySpace.SMEM),     # mean (C,) scalars
            pl.BlockSpec(memory_space=pltpu.MemorySpace.SMEM),     # 1/std (C,) scalars
            pl.BlockSpec((bn, c, h, w), lambda i: (i, 0, 0, 0)),   # image tile (raw dtype)
        ],
        out_specs=pl.BlockSpec((bn, c, ch, cw), lambda i: (i, 0, 0, 0)),
        compiler_params=pltpu.CompilerParams(
            dimension_semantics=("parallel",),
            vmem_limit_bytes=vmem_limit),
        cost_estimate=pl.CostEstimate(flops=flops, transcendentals=0,
                                      bytes_accessed=bytes_accessed),
    )(rh, rwt, mean_s, inv_std_s, img)
    return out


# ----------------------------------------------------------------------------
# Pure-JAX reference (same interpolation matrices) for sanity checks
# ----------------------------------------------------------------------------
def _reference(img, *, crop_size, resize_size, mean, std):
    n, c, h, w = img.shape
    new_h, new_w = _resized_output_size(h, w, resize_size)
    top = _crop_offset(new_h, crop_size)
    left = _crop_offset(new_w, crop_size)
    rh = _crop_matrix(_bilinear_matrix(new_h, h), crop_size, top)
    rw = _crop_matrix(_bilinear_matrix(new_w, w), crop_size, left)
    x = img.astype(jnp.float32)
    res = jnp.einsum("ip,ncpq,jq->ncij", rh, x, rw,
                     precision=jax.lax.Precision.HIGHEST)
    if img.dtype == jnp.uint8:
        res = jnp.clip(jnp.round(res), 0.0, 255.0) / 255.0
    m = jnp.asarray(mean, jnp.float32).reshape(1, c, 1, 1)
    s = jnp.asarray(std, jnp.float32).reshape(1, c, 1, 1)
    return (res - m) / s


if __name__ == "__main__":
    key = jax.random.PRNGKey(0)
    mean = (0.485, 0.456, 0.406)
    std = (0.229, 0.224, 0.225)
    k0, k1, k2 = jax.random.split(key, 3)
    level = 1.0 / (255.0 * min(std))   # one uint8 quantization level post-normalize

    # --- float32 input, exact f32-MXU path ------------------------------------
    img_f = jax.random.uniform(k0, (2, 3, 16, 16), dtype=jnp.float32)
    out_f = jax.block_until_ready(
        imagenet_eval(img_f, crop_size=8, resize_size=12, mean=mean, std=std,
                      mm_dtype=jnp.float32))
    ref_f = _reference(img_f, crop_size=8, resize_size=12, mean=mean, std=std)
    assert out_f.shape == (2, 3, 8, 8), out_f.shape
    assert jnp.allclose(out_f, ref_f, atol=1e-5, rtol=1e-5), \
        float(jnp.max(jnp.abs(out_f - ref_f)))

    # --- float32 input, default bf16-MXU path (loose tolerance) ---------------
    out_fb = jax.block_until_ready(
        imagenet_eval(img_f, crop_size=8, resize_size=12, mean=mean, std=std))
    assert float(jnp.max(jnp.abs(out_fb - ref_f))) <= 8e-2, \
        float(jnp.max(jnp.abs(out_fb - ref_f)))

    # --- uint8 input, f32 path: within one quantization level (rounding ties) -
    img_u8 = jax.random.randint(k1, (2, 3, 16, 20), 0, 256,
                                dtype=jnp.int32).astype(jnp.uint8)
    out_u = jax.block_until_ready(
        imagenet_eval(img_u8, crop_size=8, resize_size=12, mean=mean, std=std,
                      mm_dtype=jnp.float32))
    ref_u = _reference(img_u8, crop_size=8, resize_size=12, mean=mean, std=std)
    assert out_u.shape == (2, 3, 8, 8), out_u.shape
    assert float(jnp.max(jnp.abs(out_u - ref_u))) <= 1.05 * level, \
        float(jnp.max(jnp.abs(out_u - ref_u)))

    # --- uint8 input, default bf16 path: bf16 weight quantization may move a
    # value by (at most) one extra quantization level near rounding boundaries.
    out_ub = jax.block_until_ready(
        imagenet_eval(img_u8, crop_size=8, resize_size=12, mean=mean, std=std))
    assert float(jnp.max(jnp.abs(out_ub - ref_u))) <= 2.05 * level, \
        float(jnp.max(jnp.abs(out_ub - ref_u)))

    # --- crop larger than the resized image (center_crop zero-padding) --------
    out_p = jax.block_until_ready(
        imagenet_eval(img_u8, crop_size=14, resize_size=12, mean=mean, std=std,
                      mm_dtype=jnp.float32))
    ref_p = _reference(img_u8, crop_size=14, resize_size=12, mean=mean, std=std)
    assert out_p.shape == (2, 3, 14, 14), out_p.shape
    assert float(jnp.max(jnp.abs(out_p - ref_p))) <= 1.05 * level, \
        float(jnp.max(jnp.abs(out_p - ref_p)))

    # --- odd batch: cdiv grid with a ragged (masked) last block ---------------
    img_o = jax.random.randint(k2, (3, 3, 16, 16), 0, 256,
                               dtype=jnp.int32).astype(jnp.uint8)
    out_o = jax.block_until_ready(
        imagenet_eval(img_o, crop_size=8, resize_size=12, mean=mean, std=std,
                      mm_dtype=jnp.float32))
    ref_o = _reference(img_o, crop_size=8, resize_size=12, mean=mean, std=std)
    assert out_o.shape == (3, 3, 8, 8), out_o.shape
    assert float(jnp.max(jnp.abs(out_o - ref_o))) <= 1.05 * level, \
        float(jnp.max(jnp.abs(out_o - ref_o)))

    print("KERNEL_OK")
</pallas_src>

<mosaic_0001>
module attributes {stable_mosaic.version = 11 : i64} {
  func.func @_imagenet_eval_kernel(%arg0: i32, %arg1: memref<8x16xf32, #tpu.memory_space<vmem>>, %arg2: memref<16x8xf32, #tpu.memory_space<vmem>>, %arg3: memref<3xf32, #tpu.memory_space<smem>>, %arg4: memref<3xf32, #tpu.memory_space<smem>>, %arg5: memref<1x3x16x16xf32, #tpu.memory_space<vmem>>, %arg6: memref<1x3x8x8xf32, #tpu.memory_space<vmem>>) attributes {dimension_semantics = [#tpu.dimension_semantics<parallel>], iteration_bounds = array<i64: 2>, scalar_prefetch = 0 : i64, scratch_operands = 0 : i64, tpu.core_type = #tpu.core_type<tc>, window_params = [{pipeline_mode = #tpu.pipeline_mode<synchronous>, transform_indices = @transform_0, window_bounds = array<i64: 8, 16>}, {pipeline_mode = #tpu.pipeline_mode<synchronous>, transform_indices = @transform_1, window_bounds = array<i64: 16, 8>}, {transform_indices = @transform_2, window_bounds = array<i64: 3>}, {transform_indices = @transform_3, window_bounds = array<i64: 3>}, {transform_indices = @transform_4, window_bounds = array<i64: 1, 3, 16, 16>}, {transform_indices = @transform_5, window_bounds = array<i64: 1, 3, 8, 8>}]} {
    %c0 = arith.constant 0 : index
    %c0_0 = arith.constant 0 : index
    %c0_1 = arith.constant 0 : index
    %c0_2 = arith.constant 0 : index
    %0 = vector.load %arg5[%c0, %c0_0, %c0_1, %c0_2] : memref<1x3x16x16xf32, #tpu.memory_space<vmem>>, vector<1x3x16x16xf32>
    %1 = vector.shape_cast %0 : vector<1x3x16x16xf32> to vector<3x16x16xf32>
    %c0_3 = arith.constant 0 : index
    %c0_4 = arith.constant 0 : index
    %2 = vector.load %arg1[%c0_3, %c0_4] : memref<8x16xf32, #tpu.memory_space<vmem>>, vector<8x16xf32>
    %c0_5 = arith.constant 0 : index
    %c0_6 = arith.constant 0 : index
    %3 = vector.load %arg2[%c0_5, %c0_6] : memref<16x8xf32, #tpu.memory_space<vmem>>, vector<16x8xf32>
    %4 = vector.shape_cast %3 : vector<16x8xf32> to vector<1x16x8xf32>
    %5 = vector.shape_cast %4 : vector<1x16x8xf32> to vector<1x16x8xf32>
    %6 = vector.broadcast %5 : vector<1x16x8xf32> to vector<3x16x8xf32>
    %7 = vector.shape_cast %2 : vector<8x16xf32> to vector<1x8x16xf32>
    %8 = vector.shape_cast %7 : vector<1x8x16xf32> to vector<1x8x16xf32>
    %9 = vector.broadcast %8 : vector<1x8x16xf32> to vector<3x8x16xf32>
    "tpu.trace_start"() <{level = 10 : i32, message = "bhw,bwq->bhq"}> : () -> ()
    %cst = arith.constant dense<0.000000e+00> : vector<3x16x8xf32>
    %10 = tpu.matmul %1, %6, %cst {dimension_numbers = #tpu.dot_dimension_numbers<[2], [1], [1], [2], [0, 0, 0, 1, 1, 2], [0], [0]>} : vector<3x16x16xf32>, vector<3x16x8xf32>, vector<3x16x8xf32> -> vector<3x16x8xf32>
    "tpu.trace_stop"() : () -> ()
    "tpu.trace_start"() <{level = 10 : i32, message = "bph,bhq->bpq"}> : () -> ()
    %cst_7 = arith.constant dense<0.000000e+00> : vector<3x8x8xf32>
    %11 = tpu.matmul %9, %10, %cst_7 {dimension_numbers = #tpu.dot_dimension_numbers<[2], [1], [1], [2], [0, 0, 0, 1, 1, 2], [0], [0]>} : vector<3x8x16xf32>, vector<3x16x8xf32>, vector<3x8x8xf32> -> vector<3x8x8xf32>
    "tpu.trace_stop"() : () -> ()
    %12 = vector.shape_cast %11 : vector<3x8x8xf32> to vector<1x3x8x8xf32>
    %13 = vector.extract_strided_slice %12 {offsets = [0, 0, 0, 0], sizes = [1, 1, 8, 8], strides = [1, 1, 1, 1]} : vector<1x3x8x8xf32> to vector<1x1x8x8xf32>
    %14 = vector.shape_cast %13 : vector<1x1x8x8xf32> to vector<1x8x8xf32>
    %c0_8 = arith.constant 0 : index
    %15 = memref.load %arg3[%c0_8] : memref<3xf32, #tpu.memory_space<smem>>
    %16 = vector.broadcast %15 : f32 to vector<1x8x8xf32>
    %17 = arith.subf %14, %16 : vector<1x8x8xf32>
    %c0_9 = arith.constant 0 : index
    %18 = memref.load %arg4[%c0_9] : memref<3xf32, #tpu.memory_space<smem>>
    %19 = vector.broadcast %18 : f32 to vector<1x8x8xf32>
    %20 = arith.mulf %17, %19 : vector<1x8x8xf32>
    %c0_10 = arith.constant 0 : index
    %c0_11 = arith.constant 0 : index
    %c0_12 = arith.constant 0 : index
    %c0_13 = arith.constant 0 : index
    %21 = vector.load %arg6[%c0_10, %c0_11, %c0_12, %c0_13] : memref<1x3x8x8xf32, #tpu.memory_space<vmem>>, vector<1x1x8x8xf32>
    %22 = vector.shape_cast %21 : vector<1x1x8x8xf32> to vector<1x8x8xf32>
    %23 = vector.shape_cast %20 : vector<1x8x8xf32> to vector<1x1x8x8xf32>
    tpu.vector_store %arg6[%c0_10, %c0_11, %c0_12, %c0_13], %23 {strides = array<i32>} : memref<1x3x8x8xf32, #tpu.memory_space<vmem>>, vector<1x1x8x8xf32>,
    %24 = vector.extract_strided_slice %12 {offsets = [0, 1, 0, 0], sizes = [1, 1, 8, 8], strides = [1, 1, 1, 1]} : vector<1x3x8x8xf32> to vector<1x1x8x8xf32>
    %25 = vector.shape_cast %24 : vector<1x1x8x8xf32> to vector<1x8x8xf32>
    %c1 = arith.constant 1 : index
    %26 = memref.load %arg3[%c1] : memref<3xf32, #tpu.memory_space<smem>>
    %27 = vector.broadcast %26 : f32 to vector<1x8x8xf32>
    %28 = arith.subf %25, %27 : vector<1x8x8xf32>
    %c1_14 = arith.constant 1 : index
    %29 = memref.load %arg4[%c1_14] : memref<3xf32, #tpu.memory_space<smem>>
    %30 = vector.broadcast %29 : f32 to vector<1x8x8xf32>
    %31 = arith.mulf %28, %30 : vector<1x8x8xf32>
    %c0_15 = arith.constant 0 : index
    %c1_16 = arith.constant 1 : index
    %c0_17 = arith.constant 0 : index
    %c0_18 = arith.constant 0 : index
    %32 = vector.load %arg6[%c0_15, %c1_16, %c0_17, %c0_18] : memref<1x3x8x8xf32, #tpu.memory_space<vmem>>, vector<1x1x8x8xf32>
    %33 = vector.shape_cast %32 : vector<1x1x8x8xf32> to vector<1x8x8xf32>
    %34 = vector.shape_cast %31 : vector<1x8x8xf32> to vector<1x1x8x8xf32>
    tpu.vector_store %arg6[%c0_15, %c1_16, %c0_17, %c0_18], %34 {strides = array<i32>} : memref<1x3x8x8xf32, #tpu.memory_space<vmem>>, vector<1x1x8x8xf32>,
    %35 = vector.extract_strided_slice %12 {offsets = [0, 2, 0, 0], sizes = [1, 1, 8, 8], strides = [1, 1, 1, 1]} : vector<1x3x8x8xf32> to vector<1x1x8x8xf32>
    %36 = vector.shape_cast %35 : vector<1x1x8x8xf32> to vector<1x8x8xf32>
    %c2 = arith.constant 2 : index
    %37 = memref.load %arg3[%c2] : memref<3xf32, #tpu.memory_space<smem>>
    %38 = vector.broadcast %37 : f32 to vector<1x8x8xf32>
    %39 = arith.subf %36, %38 : vector<1x8x8xf32>
    %c2_19 = arith.constant 2 : index
    %40 = memref.load %arg4[%c2_19] : memref<3xf32, #tpu.memory_space<smem>>
    %41 = vector.broadcast %40 : f32 to vector<1x8x8xf32>
    %42 = arith.mulf %39, %41 : vector<1x8x8xf32>
    %c0_20 = arith.constant 0 : index
    %c2_21 = arith.constant 2 : index
    %c0_22 = arith.constant 0 : index
    %c0_23 = arith.constant 0 : index
    %43 = vector.load %arg6[%c0_20, %c2_21, %c0_22, %c0_23] : memref<1x3x8x8xf32, #tpu.memory_space<vmem>>, vector<1x1x8x8xf32>
    %44 = vector.shape_cast %43 : vector<1x1x8x8xf32> to vector<1x8x8xf32>
    %45 = vector.shape_cast %42 : vector<1x8x8xf32> to vector<1x1x8x8xf32>
    tpu.vector_store %arg6[%c0_20, %c2_21, %c0_22, %c0_23], %45 {strides = array<i32>} : memref<1x3x8x8xf32, #tpu.memory_space<vmem>>, vector<1x1x8x8xf32>,
    return
  }
  func.func @transform_0(%arg0: i32) -> (i32, i32) {
    %c0_i32 = arith.constant 0 : i32
    %c0_i32_0 = arith.constant 0 : i32
    %c0_i32_1 = arith.constant 0 : i32
    return %c0_i32, %c0_i32_0 : i32, i32
  }
  func.func @transform_1(%arg0: i32) -> (i32, i32) {
    %c0_i32 = arith.constant 0 : i32
    %c0_i32_0 = arith.constant 0 : i32
    %c0_i32_1 = arith.constant 0 : i32
    return %c0_i32, %c0_i32_0 : i32, i32
  }
  func.func @transform_2(%arg0: i32) -> i32 {
    %c0_i32 = arith.constant 0 : i32
    %c0_i32_0 = arith.constant 0 : i32
    return %c0_i32 : i32
  }
  func.func @transform_3(%arg0: i32) -> i32 {
    %c0_i32 = arith.constant 0 : i32
    %c0_i32_0 = arith.constant 0 : i32
    return %c0_i32 : i32
  }
  func.func @transform_4(%arg0: i32) -> (i32, i32, i32, i32) {
    %c0_i32 = arith.constant 0 : i32
    %c0_i32_0 = arith.constant 0 : i32
    %c0_i32_1 = arith.constant 0 : i32
    %c0_i32_2 = arith.constant 0 : i32
    return %arg0, %c0_i32, %c0_i32_0, %c0_i32_1 : i32, i32, i32, i32
  }
  func.func @transform_5(%arg0: i32) -> (i32, i32, i32, i32) {
    %c0_i32 = arith.constant 0 : i32
    %c0_i32_0 = arith.constant 0 : i32
    %c0_i32_1 = arith.constant 0 : i32
    %c0_i32_2 = arith.constant 0 : i32
    return %arg0, %c0_i32, %c0_i32_0, %c0_i32_1 : i32, i32, i32, i32
  }
}

</mosaic_0001>

<llo_original>
// kernel: imagenet_eval.1
$region0: #{imagenet_eval.1}
  #allocation0 [shape = 'u32[]', space=smem, size = 0x4, offset = 0x4, fixed_abs, tag = 'smem constant byte address 0x4 - core index']
  #allocation1 [shape = 'u32[144,128]{1,0:T(1,128)}', space=vmem, size = 0x12000, scoped, tag = 'internal scratch']
  %s0 = inlined_call_operand.vmem [shape: f32[8,16], index: 0, kind: input, shape index: {}]
  %s1 = inlined_call_operand.vmem [shape: f32[16,8], index: 1, kind: input, shape index: {}]
  %s2 = inlined_call_operand.vmem [shape: f32[3], index: 2, kind: input, shape index: {}]
  %s3 = inlined_call_operand.vmem [shape: f32[3], index: 3, kind: input, shape index: {}]
  %s4 = inlined_call_operand.vmem [shape: f32[2,3,16,16], index: 4, kind: input, shape index: {}]
  %s5 = inlined_call_operand.hbm [shape: f32[2,3,8,8], index: 5, kind: output, shape index: {}]
  %s6 = sld [smem:[#allocation0]]
  $region61: #{imagenet_eval.1} parent=0
    _
  %s8 = ssub.s32 1, %s6
  %s9 = scalar_select 0, %s8, %s6
  $region1: #{imagenet_eval.1} parent=0
    #allocation2 [shape = 'u8[512]{0}', space=smem, size = 0x200, scoped, tag = 'input window, operand 2, single buffered']
    #allocation3 [shape = 's32[2]{0}', space=sflag, size = 0x8, scoped, tag = 'scoped memory for imagenet_eval.1']
    #allocation4 [shape = 's32[2]{0}', space=sflag, size = 0x8, scoped, tag = 'scoped memory for imagenet_eval.1']
    #allocation5 [shape = 'u8[512]{0}', space=smem, size = 0x200, scoped, tag = 'input window, operand 3, single buffered']
    #allocation6 [shape = 's32[1]{0}', space=sflag, size = 0x4, scoped, tag = 'scoped memory for imagenet_eval.1']
    #allocation7 [shape = 'u8[24576]{0}', space=vmem, size = 0x6000, scoped, tag = 'output window, operand 0']
    %10 = vsyncpa [#allocation4], 0
    %11 = vsyncpa [#allocation6], 0
    %12 = vsyncpa [#allocation3], 0
    %s13 = scalar_lea.sflag [#allocation3], 1
    %14 = vsyncpa %s13, 0
    loop: start=0, step=1, limit=4
    $region2: #{imagenet_eval.1} parent=1 // loop_pre_header
      _
    $region3: #{imagenet_eval.1} parent=1 // loop_header
      %s16 = sphi 0, %s20
      %p17 = scmp.ge.s32.totalorder %s16, 4
      %s24 = sphi 0, %s24
      %s26 = sphi 0, %s24
      %s27 = sphi 0, %s26
      %s41 = sphi 0, %s27
      %s45 = sphi 0, %s45
      %s47 = sphi 0, %s45
      %s48 = sphi 0, %s47
      %s62 = sphi 0, %s48
      %s66 = sphi 0, %s66
      %s68 = sphi 0, %s66
      %s69 = sphi 0, %s68
      %s83 = sphi 0, %s69
      %s87 = sphi 0, %s87
      %s89 = sphi 0, %s87
      %s90 = sphi 0, %s89
      %s104 = sphi 0, %s90
      %s110 = sphi 0, %s112
      %s113 = sphi 0, %s110
      %s114 = sphi 0, %s113
      %s130 = sphi 0, %s114
      %s136 = sphi 0, %s138
      %s139 = sphi 0, %s136
      %s140 = sphi 0, %s139
      %s156 = sphi 0, %s140
    $region4: #{imagenet_eval.1} parent=1 // loop_header_branch
      %19 = sbr.rel (%p17) target = $region8
    $region5: #{imagenet_eval.1} parent=1 // loop_body
      %s21 = ssub.s32 %s16, 1
      %s22 = ssub.s32 %s16, 2
      %s23 = sadd.s32 %s16, 1
      %s25 = sadd.s32 %s24, 1
      %p28 = scmp.eq.s32.totalorder %s16, 1
      %p29 = scmp.ne.s32.totalorder %s24, %s26
      %p30 = scmp.eq.s32.totalorder %s16, 0
      %p31 = por %p29, %p30
      %p32 = scmp.ne.s32.totalorder %s24, %s26
      %p33 = scmp.eq.s32.totalorder %s21, 1
      %p34 = por %p32, %p33
      %p35 = scmp.ne.s32.totalorder %s26, %s27
      %p36 = scmp.eq.s32.totalorder %s21, 0
      %p37 = por %p35, %p36
      %p38 = scmp.ne.s32.totalorder %s26, %s27
      %p39 = scmp.eq.s32.totalorder %s22, 1
      %p40 = por %p38, %p39
      %p42 = scmp.ne.s32.totalorder %s27, %s41
      %p43 = scmp.eq.s32.totalorder %s22, 0
      %p44 = por %p42, %p43
      %s46 = sadd.s32 %s45, 1
      %p49 = scmp.eq.s32.totalorder %s16, 1
      %p50 = scmp.ne.s32.totalorder %s45, %s47
      %p51 = scmp.eq.s32.totalorder %s16, 0
      %p52 = por %p50, %p51
      %p53 = scmp.ne.s32.totalorder %s45, %s47
      %p54 = scmp.eq.s32.totalorder %s21, 1
      %p55 = por %p53, %p54
      %p56 = scmp.ne.s32.totalorder %s47, %s48
      %p57 = scmp.eq.s32.totalorder %s21, 0
      %p58 = por %p56, %p57
      %p59 = scmp.ne.s32.totalorder %s47, %s48
      %p60 = scmp.eq.s32.totalorder %s22, 1
      %p61 = por %p59, %p60
      %p63 = scmp.ne.s32.totalorder %s48, %s62
      %p64 = scmp.eq.s32.totalorder %s22, 0
      %p65 = por %p63, %p64
      %s67 = sadd.s32 %s66, 1
      %p70 = scmp.eq.s32.totalorder %s16, 1
      %p71 = scmp.ne.s32.totalorder %s66, %s68
      %p72 = scmp.eq.s32.totalorder %s16, 0
      %p73 = por %p71, %p72
      %p74 = scmp.ne.s32.totalorder %s66, %s68
      %p75 = scmp.eq.s32.totalorder %s21, 1
      %p76 = por %p74, %p75
      %p77 = scmp.ne.s32.totalorder %s68, %s69
      %p78 = scmp.eq.s32.totalorder %s21, 0
      %p79 = por %p77, %p78
      %p80 = scmp.ne.s32.totalorder %s68, %s69
      %p81 = scmp.eq.s32.totalorder %s22, 1
      %p82 = por %p80, %p81
      %p84 = scmp.ne.s32.totalorder %s69, %s83
      %p85 = scmp.eq.s32.totalorder %s22, 0
      %p86 = por %p84, %p85
      %s88 = sadd.s32 %s87, 1
      %p91 = scmp.eq.s32.totalorder %s16, 1
      %p92 = scmp.ne.s32.totalorder %s87, %s89
      %p93 = scmp.eq.s32.totalorder %s16, 0
      %p94 = por %p92, %p93
      %p95 = scmp.ne.s32.totalorder %s87, %s89
      %p96 = scmp.eq.s32.totalorder %s21, 1
      %p97 = por %p95, %p96
      %p98 = scmp.ne.s32.totalorder %s89, %s90
      %p99 = scmp.eq.s32.totalorder %s21, 0
      %p100 = por %p98, %p99
      %p101 = scmp.ne.s32.totalorder %s89, %s90
      %p102 = scmp.eq.s32.totalorder %s22, 1
      %p103 = por %p101, %p102
      %p105 = scmp.ne.s32.totalorder %s90, %s104
      %p106 = scmp.eq.s32.totalorder %s22, 0
      %p107 = por %p105, %p106
      %s108 = ssub.s32 %s16, %s23
      %p109 = scmp.eq.s32.totalorder %s108, 0
      %s111 = sadd.s32 %s110, 1
      %s112 = scalar_select %p109, %s110, %s111
      %p115 = pneg %p109
      %p116 = scmp.eq.s32.totalorder %s16, 1
      %p117 = por %p115, %p116
      %p118 = scmp.ne.s32.totalorder %s110, %s113
      %p119 = scmp.eq.s32.totalorder %s16, 0
      %p120 = por %p118, %p119
      %p121 = scmp.ne.s32.totalorder %s110, %s113
      %p122 = scmp.eq.s32.totalorder %s21, 1
      %p123 = por %p121, %p122
      %p124 = scmp.ne.s32.totalorder %s113, %s114
      %p125 = scmp.eq.s32.totalorder %s21, 0
      %p126 = por %p124, %p125
      %p127 = scmp.ne.s32.totalorder %s113, %s114
      %p128 = scmp.eq.s32.totalorder %s22, 1
      %p129 = por %p127, %p128
      %p131 = scmp.ne.s32.totalorder %s114, %s130
      %p132 = scmp.eq.s32.totalorder %s22, 0
      %p133 = por %p131, %p132
      %s134 = ssub.s32 %s16, %s23
      %p135 = scmp.eq.s32.totalorder %s134, 0
      %s137 = sadd.s32 %s136, 1
      %s138 = scalar_select %p135, %s136, %s137
      %p141 = pneg %p135
      %p142 = scmp.eq.s32.totalorder %s16, 1
      %p143 = por %p141, %p142
      %p144 = scmp.ne.s32.totalorder %s136, %s139
      %p145 = scmp.eq.s32.totalorder %s16, 0
      %p146 = por %p144, %p145
      %p147 = scmp.ne.s32.totalorder %s136, %s139
      %p148 = scmp.eq.s32.totalorder %s21, 1
      %p149 = por %p147, %p148
      %p150 = scmp.ne.s32.totalorder %s139, %s140
      %p151 = scmp.eq.s32.totalorder %s21, 0
      %p152 = por %p150, %p151
      %p153 = scmp.ne.s32.totalorder %s139, %s140
      %p154 = scmp.eq.s32.totalorder %s22, 1
      %p155 = por %p153, %p154
      %p157 = scmp.ne.s32.totalorder %s140, %s156
      %p158 = scmp.eq.s32.totalorder %s22, 0
      %p159 = por %p157, %p158
      %p160 = scmp.le.s32.totalorder 1, %s16
      %p161 = scmp.lt.s32.totalorder %s16, 3
      %p162 = pnand %p160, %p161
      %p163 = pneg %p162
      // Predicated region
      $region9: #{imagenet_eval.1} parent=5 // pred_check
        _
      $region10: #{imagenet_eval.1} parent=5 // pred_check_branch
        %165 = sbr.rel (%p162) target = $region12
      $region11: #{imagenet_eval.1} parent=5 // pred_region
        %s166 = ssub.s32 %s16, 1
        // Predicated region
        $region13: #{imagenet_eval.1} parent=11 // pred_check
          %p167 = pneg %p37
        $region14: #{imagenet_eval.1} parent=11 // pred_check_branch
          %169 = sbr.rel (%p167) target = $region16
        $region15: #{imagenet_eval.1} parent=11 // pred_region
          _
        $region16: #{imagenet_eval.1} parent=11 // pred_fallthru
          _
        // Predicated region
        $region17: #{imagenet_eval.1} parent=11 // pred_check
          %p170 = pneg %p58
        $region18: #{imagenet_eval.1} parent=11 // pred_check_branch
          %172 = sbr.rel (%p170) target = $region20
        $region19: #{imagenet_eval.1} parent=11 // pred_region
          _
        $region20: #{imagenet_eval.1} parent=11 // pred_fallthru
          _
        // Predicated region
        $region21: #{imagenet_eval.1} parent=11 // pred_check
          %p173 = pneg %p79
        $region22: #{imagenet_eval.1} parent=11 // pred_check_branch
          %175 = sbr.rel (%p173) target = $region24
        $region23: #{imagenet_eval.1} parent=11 // pred_region
          %s177 = ssub.s32 16, 16
          %178 = vsyncadd [#allocation4], %s177
          %s180 = sshll.u32 %s2, 4
          %s181 = int_to_ptr.vmem [resolvable:$true] %s180
          %183 = dma.vmem_to_smem %s181, 16, [#allocation2], [#allocation4]
        $region24: #{imagenet_eval.1} parent=11 // pred_fallthru
          _
        // Predicated region
        $region25: #{imagenet_eval.1} parent=11 // pred_check
          %p184 = pneg %p100
        $region26: #{imagenet_eval.1} parent=11 // pred_check_branch
          %186 = sbr.rel (%p184) target = $region28
        $region27: #{imagenet_eval.1} parent=11 // pred_region
          %s188 = ssub.s32 16, 16
          %189 = vsyncadd [#allocation6], %s188
          %s191 = sshll.u32 %s3, 4
          %s192 = int_to_ptr.vmem [resolvable:$true] %s191
          %194 = dma.vmem_to_smem %s192, 16, [#allocation5], [#allocation6]
        $region28: #{imagenet_eval.1} parent=11 // pred_fallthru
          _
      $region12: #{imagenet_eval.1} parent=5 // pred_fallthru
        _
      %p195 = scmp.lt.s32.totalorder %s16, 2
      // Predicated region
      $region29: #{imagenet_eval.1} parent=5 // pred_check
        %p196 = pneg %p195
      $region30: #{imagenet_eval.1} parent=5 // pred_check_branch
        %198 = sbr.rel (%p196) target = $region32
      $region31: #{imagenet_eval.1} parent=5 // pred_region
        // Predicated region
        $region33: #{imagenet_eval.1} parent=31 // pred_check
          %p199 = pneg %p120
        $region34: #{imagenet_eval.1} parent=31 // pred_check_branch
          %201 = sbr.rel (%p199) target = $region36
        $region35: #{imagenet_eval.1} parent=31 // pred_region
          %p202 = scmp.lt.s32.totalorder %s16, 1
          %s203 = scalar_select %p202, %s16, 1
          %s204 = smul.addr %s203, 6
          %s205 = smul.addr %s204, 8
          %s206 = scalar_lea.vmem %s4, %s205
        $region36: #{imagenet_eval.1} parent=31 // pred_fallthru
          _
      $region32: #{imagenet_eval.1} parent=5 // pred_fallthru
        _
      %p207 = scmp.le.s32.totalorder 1, %s16
      %p208 = scmp.lt.s32.totalorder %s16, 3
      %p209 = pnand %p207, %p208
      %p210 = pneg %p209
      // Predicated region
      $region37: #{imagenet_eval.1} parent=5 // pred_check
        _
      $region38: #{imagenet_eval.1} parent=5 // pred_check_branch
        %212 = sbr.rel (%p209) target = $region40
      $region39: #{imagenet_eval.1} parent=5 // pred_region
        %s213 = ssub.s32 %s16, 1
        // Predicated region
        $region41: #{imagenet_eval.1} parent=39 // pred_check
          %p214 = pneg %p79
        $region42: #{imagenet_eval.1} parent=39 // pred_check_branch
          %216 = sbr.rel (%p214) target = $region44
        $region43: #{imagenet_eval.1} parent=39 // pred_region
          %217 = dma.done [#allocation4], 16
        $region44: #{imagenet_eval.1} parent=39 // pred_fallthru
          _
        // Predicated region
        $region45: #{imagenet_eval.1} parent=39 // pred_check
          %p218 = pneg %p100
        $region46: #{imagenet_eval.1} parent=39 // pred_check_branch
          %220 = sbr.rel (%p218) target = $region48
        $region47: #{imagenet_eval.1} parent=39 // pred_region
          %221 = dma.done [#allocation6], 16
        $region48: #{imagenet_eval.1} parent=39 // pred_fallthru
          _
        %222 = sfence
        %p223 = pneg %p37
        %p224 = pneg %p34
        %p225 = pneg %p58
        %p226 = pneg %p55
        %p227 = pneg %p79
        %p228 = pneg %p76
        %p229 = pneg %p100
        %p230 = pneg %p97
        %p231 = scmp.lt.s32.totalorder %s21, 1
        %s232 = scalar_select %p231, %s21, 1
        %s233 = smul.addr %s232, 6
        %s234 = smul.addr %s233, 8
        %s235 = scalar_lea.vmem %s4, %s234
        %p236 = pneg %p126
        %p237 = pneg %p123
        %p238 = pneg %p152
        %p239 = pneg %p149
        %s240 = sand.u32 %s139, 1
        %s241 = scalar_lea.sflag [#allocation3], %s240
        %s242 = sand.u32 %s139, 1
        %s243 = smul.addr %s242, 24
        %s244 = scalar_lea.vmem [#allocation7], %s243
        %p245 = scmp.lt.s32.totalorder %s21, 1
        %s246 = scalar_select %p245, %s21, 1
        %s247 = smul.addr %s246, 6
        %s248 = smul.addr %s247, 8
        %s249 = scalar_lea.vmem %s4, %s248
        %v250 = vld [vmem:[%s249] sm:$0xff]
        %v251 = vld [vmem:[%s249 + $0x8] sm:$0xff]
        %v252 = vld [vmem:[%s249 + $0x10] sm:$0xff]
        %v253 = vld [vmem:[%s249 + $0x18] sm:$0xff]
        %v254 = vld [vmem:[%s249 + $0x20] sm:$0xff]
        %v255 = vld [vmem:[%s249 + $0x28] sm:$0xff]
        %v256 = vld [vmem:[%s0] sm:$0xff]
        %v257 = vld [vmem:[%s1] sm:$0xff]
        %v258 = vld [vmem:[%s1 + $0x8] sm:$0xff]
        %vm259 = vcmask 130048
        %v261 = vsel %vm259, %v250, 0
        %v264 = vsel %vm259, %v251, 0
        %266 = vmatprep.subr.mxu0 0.0
        %267 = vmatpush1.msra.mxu0 %v257
        %268 = vmatprep.subr.mxu0 0.0
        %269 = vmatpush1.msra.mxu0 %v258
        %270 = vmatprep.subr.mxu0 0.0
        %271 = vmatpush1.msra.mxu0 0.0
        %272 = vmatprep.subr.mxu0 0.0
        %273 = vmatpush1.msra.mxu0 0.0
        %274 = vmatprep.subr.mxu0 0.0
        %275 = vmatpush1.msra.mxu0 0.0
        %276 = vmatprep.subr.mxu0 0.0
        %277 = vmatpush1.msra.mxu0 0.0
        %278 = vmatprep.subr.mxu0 0.0
        %279 = vmatpush1.msra.mxu0 0.0
        %280 = vmatprep.subr.mxu0 0.0
        %281 = vmatpush1.msra.mxu0 0.0
        %282 = vmatprep.subr.mxu0 0.0
        %283 = vmatpush1.msra.mxu0 0.0
        %284 = vmatprep.subr.mxu0 0.0
        %285 = vmatpush1.msra.mxu0 0.0
        %286 = vmatprep.subr.mxu0 0.0
        %287 = vmatpush1.msra.mxu0 0.0
        %288 = vmatprep.subr.mxu0 0.0
        %289 = vmatpush1.msra.mxu0 0.0
        %290 = vmatprep.subr.mxu0 0.0
        %291 = vmatpush1.msra.mxu0 0.0
        %292 = vmatprep.subr.mxu0 0.0
        %293 = vmatpush1.msra.mxu0 0.0
        %294 = vmatprep.subr.mxu0 0.0
        %295 = vmatpush1.msra.mxu0 0.0
        %296 = vmatprep.subr.mxu0 0.0
        %297 = vmatpush1.msra.mxu0 0.0
        %298 = vmatprep.subr.mxu0 0.0
        %299 = vmatpush1.msra.mxu0 0.0
        %300 = vmatprep.subr.mxu0 0.0
        %301 = vmatpush1.msra.mxu0 0.0
        %302 = vmatprep.subr.mxu0 0.0
        %303 = vmatpush1.msra.mxu0 0.0
        %304 = vmatprep.subr.mxu0 0.0
        %305 = vmatpush1.msra.mxu0 0.0
        %306 = vmatprep.subr.mxu0 0.0
        %307 = vmatpush1.msra.mxu0 0.0
        %308 = vmatprep.subr.mxu0 0.0
        %309 = vmatpush1.msra.mxu0 0.0
        %310 = vmatprep.subr.mxu0 0.0
        %311 = vmatpush1.msra.mxu0 0.0
        %312 = vmatprep.subr.mxu0 0.0
        %313 = vmatpush1.msra.mxu0 0.0
        %314 = vmatprep.subr.mxu0 0.0
        %315 = vmatpush1.msra.mxu0 0.0
        %316 = vmatprep.subr.mxu0 0.0
        %317 = vmatpush1.msra.mxu0 0.0
        %318 = vmatprep.subr.mxu0 0.0
        %319 = vmatpush1.msra.mxu0 0.0
        %320 = vmatprep.subr.mxu0 0.0
        %321 = vmatpush1.msra.mxu0 0.0
        %322 = vmatprep.subr.mxu0 0.0
        %323 = vmatpush1.msra.mxu0 0.0
        %324 = vmatprep.subr.mxu0 0.0
        %325 = vmatpush1.msra.mxu0 0.0
        %326 = vmatprep.subr.mxu0 0.0
        %327 = vmatpush1.msra.mxu0 0.0
        %328 = vmatprep.subr.mxu0 0.0
        %329 = vmatpush1.msra.mxu0 0.0
        %330 = vmatprep.mubr.f32.mxu0 0.0
        %331 = vmatmul.mubr.f32.gmra.mrb[0].mxu0 %v261
        %v332 = vpop.f32.mrb[0].mxu0
        %v333 = vadd.f32 0.0, %v332
        %v334 = vpop.f32.mrb[0].mxu0
        %335 = vmatprep.mubr.f32.mxu0 0.0
        %336 = vmatmul.mubr.f32.gmra.mrb[0].mxu0 %v264
        %v337 = vpop.f32.mrb[0].mxu0
        %v338 = vadd.f32 0.0, %v337
        %v339 = vpop.f32.mrb[0].mxu0
        %340 = vdwg.mxu0
        %v342 = vsel %vm259, %v252, 0
        %v345 = vsel %vm259, %v253, 0
        %347 = vmatprep.subr.mxu0 0.0
        %348 = vmatpush1.msra.mxu0 %v257
        %349 = vmatprep.subr.mxu0 0.0
        %350 = vmatpush1.msra.mxu0 %v258
        %351 = vmatprep.subr.mxu0 0.0
        %352 = vmatpush1.msra.mxu0 0.0
        %353 = vmatprep.subr.mxu0 0.0
        %354 = vmatpush1.msra.mxu0 0.0
        %355 = vmatprep.subr.mxu0 0.0
        %356 = vmatpush1.msra.mxu0 0.0
        %357 = vmatprep.subr.mxu0 0.0
        %358 = vmatpush1.msra.mxu0 0.0
        %359 = vmatprep.subr.mxu0 0.0
        %360 = vmatpush1.msra.mxu0 0.0
        %361 = vmatprep.subr.mxu0 0.0
        %362 = vmatpush1.msra.mxu0 0.0
        %363 = vmatprep.subr.mxu0 0.0
        %364 = vmatpush1.msra.mxu0 0.0
        %365 = vmatprep.subr.mxu0 0.0
        %366 = vmatpush1.msra.mxu0 0.0
        %367 = vmatprep.subr.mxu0 0.0
        %368 = vmatpush1.msra.mxu0 0.0
        %369 = vmatprep.subr.mxu0 0.0
        %370 = vmatpush1.msra.mxu0 0.0
        %371 = vmatprep.subr.mxu0 0.0
        %372 = vmatpush1.msra.mxu0 0.0
        %373 = vmatprep.subr.mxu0 0.0
        %374 = vmatpush1.msra.mxu0 0.0
        %375 = vmatprep.subr.mxu0 0.0
        %376 = vmatpush1.msra.mxu0 0.0
        %377 = vmatprep.subr.mxu0 0.0
        %378 = vmatpush1.msra.mxu0 0.0
        %379 = vmatprep.subr.mxu0 0.0
        %380 = vmatpush1.msra.mxu0 0.0
        %381 = vmatprep.subr.mxu0 0.0
        %382 = vmatpush1.msra.mxu0 0.0
        %383 = vmatprep.subr.mxu0 0.0
        %384 = vmatpush1.msra.mxu0 0.0
        %385 = vmatprep.subr.mxu0 0.0
        %386 = vmatpush1.msra.mxu0 0.0
        %387 = vmatprep.subr.mxu0 0.0
        %388 = vmatpush1.msra.mxu0 0.0
        %389 = vmatprep.subr.mxu0 0.0
        %390 = vmatpush1.msra.mxu0 0.0
        %391 = vmatprep.subr.mxu0 0.0
        %392 = vmatpush1.msra.mxu0 0.0
        %393 = vmatprep.subr.mxu0 0.0
        %394 = vmatpush1.msra.mxu0 0.0
        %395 = vmatprep.subr.mxu0 0.0
        %396 = vmatpush1.msra.mxu0 0.0
        %397 = vmatprep.subr.mxu0 0.0
        %398 = vmatpush1.msra.mxu0 0.0
        %399 = vmatprep.subr.mxu0 0.0
        %400 = vmatpush1.msra.mxu0 0.0
        %401 = vmatprep.subr.mxu0 0.0
        %402 = vmatpush1.msra.mxu0 0.0
        %403 = vmatprep.subr.mxu0 0.0
        %404 = vmatpush1.msra.mxu0 0.0
        %405 = vmatprep.subr.mxu0 0.0
        %406 = vmatpush1.msra.mxu0 0.0
        %407 = vmatprep.subr.mxu0 0.0
        %408 = vmatpush1.msra.mxu0 0.0
        %409 = vmatprep.subr.mxu0 0.0
        %410 = vmatpush1.msra.mxu0 0.0
        %411 = vmatprep.mubr.f32.mxu0 0.0
        %412 = vmatmul.mubr.f32.gmra.mrb[0].mxu0 %v342
        %v413 = vpop.f32.mrb[0].mxu0
        %v414 = vadd.f32 0.0, %v413
        %v415 = vpop.f32.mrb[0].mxu0
        %416 = vmatprep.mubr.f32.mxu0 0.0
        %417 = vmatmul.mubr.f32.gmra.mrb[0].mxu0 %v345
        %v418 = vpop.f32.mrb[0].mxu0
        %v419 = vadd.f32 0.0, %v418
        %v420 = vpop.f32.mrb[0].mxu0
        %421 = vdwg.mxu0
        %v423 = vsel %vm259, %v254, 0
        %v426 = vsel %vm259, %v255, 0
        %428 = vmatprep.subr.mxu0 0.0
        %429 = vmatpush1.msra.mxu0 %v257
        %430 = vmatprep.subr.mxu0 0.0
        %431 = vmatpush1.msra.mxu0 %v258
        %432 = vmatprep.subr.mxu0 0.0
        %433 = vmatpush1.msra.mxu0 0.0
        %434 = vmatprep.subr.mxu0 0.0
        %435 = vmatpush1.msra.mxu0 0.0
        %436 = vmatprep.subr.mxu0 0.0
        %437 = vmatpush1.msra.mxu0 0.0
        %438 = vmatprep.subr.mxu0 0.0
        %439 = vmatpush1.msra.mxu0 0.0
        %440 = vmatprep.subr.mxu0 0.0
        %441 = vmatpush1.msra.mxu0 0.0
        %442 = vmatprep.subr.mxu0 0.0
        %443 = vmatpush1.msra.mxu0 0.0
        %444 = vmatprep.subr.mxu0 0.0
        %445 = vmatpush1.msra.mxu0 0.0
        %446 = vmatprep.subr.mxu0 0.0
        %447 = vmatpush1.msra.mxu0 0.0
        %448 = vmatprep.subr.mxu0 0.0
        %449 = vmatpush1.msra.mxu0 0.0
        %450 = vmatprep.subr.mxu0 0.0
        %451 = vmatpush1.msra.mxu0 0.0
        %452 = vmatprep.subr.mxu0 0.0
        %453 = vmatpush1.msra.mxu0 0.0
        %454 = vmatprep.subr.mxu0 0.0
        %455 = vmatpush1.msra.mxu0 0.0
        %456 = vmatprep.subr.mxu0 0.0
        %457 = vmatpush1.msra.mxu0 0.0
        %458 = vmatprep.subr.mxu0 0.0
        %459 = vmatpush1.msra.mxu0 0.0
        %460 = vmatprep.subr.mxu0 0.0
        %461 = vmatpush1.msra.mxu0 0.0
        %462 = vmatprep.subr.mxu0 0.0
        %463 = vmatpush1.msra.mxu0 0.0
        %464 = vmatprep.subr.mxu0 0.0
        %465 = vmatpush1.msra.mxu0 0.0
        %466 = vmatprep.subr.mxu0 0.0
        %467 = vmatpush1.msra.mxu0 0.0
        %468 = vmatprep.subr.mxu0 0.0
        %469 = vmatpush1.msra.mxu0 0.0
        %470 = vmatprep.subr.mxu0 0.0
        %471 = vmatpush1.msra.mxu0 0.0
        %472 = vmatprep.subr.mxu0 0.0
        %473 = vmatpush1.msra.mxu0 0.0
        %474 = vmatprep.subr.mxu0 0.0
        %475 = vmatpush1.msra.mxu0 0.0
        %476 = vmatprep.subr.mxu0 0.0
        %477 = vmatpush1.msra.mxu0 0.0
        %478 = vmatprep.subr.mxu0 0.0
        %479 = vmatpush1.msra.mxu0 0.0
        %480 = vmatprep.subr.mxu0 0.0
        %481 = vmatpush1.msra.mxu0 0.0
        %482 = vmatprep.subr.mxu0 0.0
        %483 = vmatpush1.msra.mxu0 0.0
        %484 = vmatprep.subr.mxu0 0.0
        %485 = vmatpush1.msra.mxu0 0.0
        %486 = vmatprep.subr.mxu0 0.0
        %487 = vmatpush1.msra.mxu0 0.0
        %488 = vmatprep.subr.mxu0 0.0
        %489 = vmatpush1.msra.mxu0 0.0
        %490 = vmatprep.subr.mxu0 0.0
        %491 = vmatpush1.msra.mxu0 0.0
        %492 = vmatprep.mubr.f32.mxu0 0.0
        %493 = vmatmul.mubr.f32.gmra.mrb[0].mxu0 %v423
        %v494 = vpop.f32.mrb[0].mxu0
        %v495 = vadd.f32 0.0, %v494
        %v496 = vpop.f32.mrb[0].mxu0
        %497 = vmatprep.mubr.f32.mxu0 0.0
        %498 = vmatmul.mubr.f32.gmra.mrb[0].mxu0 %v426
        %v499 = vpop.f32.mrb[0].mxu0
        %v500 = vadd.f32 0.0, %v499
        %v501 = vpop.f32.mrb[0].mxu0
        %502 = vdwg.mxu0
        %v504 = vsel %vm259, %v256, 0
        %506 = vmatprep.subr.mxu0 0.0
        %507 = vmatpush1.msra.mxu0 %v333
        %508 = vmatprep.subr.mxu0 0.0
        %509 = vmatpush1.msra.mxu0 %v338
        %510 = vmatprep.subr.mxu0 0.0
        %511 = vmatpush1.msra.mxu0 0.0
        %512 = vmatprep.subr.mxu0 0.0
        %513 = vmatpush1.msra.mxu0 0.0
        %514 = vmatprep.subr.mxu0 0.0
        %515 = vmatpush1.msra.mxu0 0.0
        %516 = vmatprep.subr.mxu0 0.0
        %517 = vmatpush1.msra.mxu0 0.0
        %518 = vmatprep.subr.mxu0 0.0
        %519 = vmatpush1.msra.mxu0 0.0
        %520 = vmatprep.subr.mxu0 0.0
        %521 = vmatpush1.msra.mxu0 0.0
        %522 = vmatprep.subr.mxu0 0.0
        %523 = vmatpush1.msra.mxu0 0.0
        %524 = vmatprep.subr.mxu0 0.0
        %525 = vmatpush1.msra.mxu0 0.0
        %526 = vmatprep.subr.mxu0 0.0
        %527 = vmatpush1.msra.mxu0 0.0
        %528 = vmatprep.subr.mxu0 0.0
        %529 = vmatpush1.msra.mxu0 0.0
        %530 = vmatprep.subr.mxu0 0.0
        %531 = vmatpush1.msra.mxu0 0.0
        %532 = vmatprep.subr.mxu0 0.0
        %533 = vmatpush1.msra.mxu0 0.0
        %534 = vmatprep.subr.mxu0 0.0
        %535 = vmatpush1.msra.mxu0 0.0
        %536 = vmatprep.subr.mxu0 0.0
        %537 = vmatpush1.msra.mxu0 0.0
        %538 = vmatprep.subr.mxu0 0.0
        %539 = vmatpush1.msra.mxu0 0.0
        %540 = vmatprep.subr.mxu0 0.0
        %541 = vmatpush1.msra.mxu0 0.0
        %542 = vmatprep.subr.mxu0 0.0
        %543 = vmatpush1.msra.mxu0 0.0
        %544 = vmatprep.subr.mxu0 0.0
        %545 = vmatpush1.msra.mxu0 0.0
        %546 = vmatprep.subr.mxu0 0.0
        %547 = vmatpush1.msra.mxu0 0.0
        %548 = vmatprep.subr.mxu0 0.0
        %549 = vmatpush1.msra.mxu0 0.0
        %550 = vmatprep.subr.mxu0 0.0
        %551 = vmatpush1.msra.mxu0 0.0
        %552 = vmatprep.subr.mxu0 0.0
        %553 = vmatpush1.msra.mxu0 0.0
        %554 = vmatprep.subr.mxu0 0.0
        %555 = vmatpush1.msra.mxu0 0.0
        %556 = vmatprep.subr.mxu0 0.0
        %557 = vmatpush1.msra.mxu0 0.0
        %558 = vmatprep.subr.mxu0 0.0
        %559 = vmatpush1.msra.mxu0 0.0
        %560 = vmatprep.subr.mxu0 0.0
        %561 = vmatpush1.msra.mxu0 0.0
        %562 = vmatprep.subr.mxu0 0.0
        %563 = vmatpush1.msra.mxu0 0.0
        %564 = vmatprep.subr.mxu0 0.0
        %565 = vmatpush1.msra.mxu0 0.0
        %566 = vmatprep.subr.mxu0 0.0
        %567 = vmatpush1.msra.mxu0 0.0
        %568 = vmatprep.subr.mxu0 0.0
        %569 = vmatpush1.msra.mxu0 0.0
        %570 = vmatprep.mubr.f32.mxu0 0.0
        %571 = vmatmul.mubr.f32.gmra.mrb[0].mxu0 %v504
        %v572 = vpop.f32.mrb[0].mxu0
        %v573 = vadd.f32 0.0, %v572
        %v574 = vpop.f32.mrb[0].mxu0
        %575 = vdwg.mxu0
        %576 = vmatprep.subr.mxu0 0.0
        %577 = vmatpush1.msra.mxu0 %v414
        %578 = vmatprep.subr.mxu0 0.0
        %579 = vmatpush1.msra.mxu0 %v419
        %580 = vmatprep.subr.mxu0 0.0
        %581 = vmatpush1.msra.mxu0 0.0
        %582 = vmatprep.subr.mxu0 0.0
        %583 = vmatpush1.msra.mxu0 0.0
        %584 = vmatprep.subr.mxu0 0.0
        %585 = vmatpush1.msra.mxu0 0.0
        %586 = vmatprep.subr.mxu0 0.0
        %587 = vmatpush1.msra.mxu0 0.0
        %588 = vmatprep.subr.mxu0 0.0
        %589 = vmatpush1.msra.mxu0 0.0
        %590 = vmatprep.subr.mxu0 0.0
        %591 = vmatpush1.msra.mxu0 0.0
        %592 = vmatprep.subr.mxu0 0.0
        %593 = vmatpush1.msra.mxu0 0.0
        %594 = vmatprep.subr.mxu0 0.0
        %595 = vmatpush1.msra.mxu0 0.0
        %596 = vmatprep.subr.mxu0 0.0
        %597 = vmatpush1.msra.mxu0 0.0
        %598 = vmatprep.subr.mxu0 0.0
        %599 = vmatpush1.msra.mxu0 0.0
        %600 = vmatprep.subr.mxu0 0.0
        %601 = vmatpush1.msra.mxu0 0.0
        %602 = vmatprep.subr.mxu0 0.0
        %603 = vmatpush1.msra.mxu0 0.0
        %604 = vmatprep.subr.mxu0 0.0
        %605 = vmatpush1.msra.mxu0 0.0
        %606 = vmatprep.subr.mxu0 0.0
        %607 = vmatpush1.msra.mxu0 0.0
        %608 = vmatprep.subr.mxu0 0.0
        %609 = vmatpush1.msra.mxu0 0.0
        %610 = vmatprep.subr.mxu0 0.0
        %611 = vmatpush1.msra.mxu0 0.0
        %612 = vmatprep.subr.mxu0 0.0
        %613 = vmatpush1.msra.mxu0 0.0
        %614 = vmatprep.subr.mxu0 0.0
        %615 = vmatpush1.msra.mxu0 0.0
        %616 = vmatprep.subr.mxu0 0.0
        %617 = vmatpush1.msra.mxu0 0.0
        %618 = vmatprep.subr.mxu0 0.0
        %619 = vmatpush1.msra.mxu0 0.0
        %620 = vmatprep.subr.mxu0 0.0
        %621 = vmatpush1.msra.mxu0 0.0
        %622 = vmatprep.subr.mxu0 0.0
        %623 = vmatpush1.msra.mxu0 0.0
        %624 = vmatprep.subr.mxu0 0.0
        %625 = vmatpush1.msra.mxu0 0.0
        %626 = vmatprep.subr.mxu0 0.0
        %627 = vmatpush1.msra.mxu0 0.0
        %628 = vmatprep.subr.mxu0 0.0
        %629 = vmatpush1.msra.mxu0 0.0
        %630 = vmatprep.subr.mxu0 0.0
        %631 = vmatpush1.msra.mxu0 0.0
        %632 = vmatprep.subr.mxu0 0.0
        %633 = vmatpush1.msra.mxu0 0.0
        %634 = vmatprep.subr.mxu0 0.0
        %635 = vmatpush1.msra.mxu0 0.0
        %636 = vmatprep.subr.mxu0 0.0
        %637 = vmatpush1.msra.mxu0 0.0
        %638 = vmatprep.subr.mxu0 0.0
        %639 = vmatpush1.msra.mxu0 0.0
        %640 = vmatprep.mubr.f32.mxu0 0.0
        %641 = vmatmul.mubr.f32.gmra.mrb[0].mxu0 %v504
        %v642 = vpop.f32.mrb[0].mxu0
        %v643 = vadd.f32 0.0, %v642
        %v644 = vpop.f32.mrb[0].mxu0
        %645 = vdwg.mxu0
        %646 = vmatprep.subr.mxu0 0.0
        %647 = vmatpush1.msra.mxu0 %v495
        %648 = vmatprep.subr.mxu0 0.0
        %649 = vmatpush1.msra.mxu0 %v500
        %650 = vmatprep.subr.mxu0 0.0
        %651 = vmatpush1.msra.mxu0 0.0
        %652 = vmatprep.subr.mxu0 0.0
        %653 = vmatpush1.msra.mxu0 0.0
        %654 = vmatprep.subr.mxu0 0.0
        %655 = vmatpush1.msra.mxu0 0.0
        %656 = vmatprep.subr.mxu0 0.0
        %657 = vmatpush1.msra.mxu0 0.0
        %658 = vmatprep.subr.mxu0 0.0
        %659 = vmatpush1.msra.mxu0 0.0
        %660 = vmatprep.subr.mxu0 0.0
        %661 = vmatpush1.msra.mxu0 0.0
        %662 = vmatprep.subr.mxu0 0.0
        %663 = vmatpush1.msra.mxu0 0.0
        %664 = vmatprep.subr.mxu0 0.0
        %665 = vmatpush1.msra.mxu0 0.0
        %666 = vmatprep.subr.mxu0 0.0
        %667 = vmatpush1.msra.mxu0 0.0
        %668 = vmatprep.subr.mxu0 0.0
        %669 = vmatpush1.msra.mxu0 0.0
        %670 = vmatprep.subr.mxu0 0.0
        %671 = vmatpush1.msra.mxu0 0.0
        %672 = vmatprep.subr.mxu0 0.0
        %673 = vmatpush1.msra.mxu0 0.0
        %674 = vmatprep.subr.mxu0 0.0
        %675 = vmatpush1.msra.mxu0 0.0
        %676 = vmatprep.subr.mxu0 0.0
        %677 = vmatpush1.msra.mxu0 0.0
        %678 = vmatprep.subr.mxu0 0.0
        %679 = vmatpush1.msra.mxu0 0.0
        %680 = vmatprep.subr.mxu0 0.0
        %681 = vmatpush1.msra.mxu0 0.0
        %682 = vmatprep.subr.mxu0 0.0
        %683 = vmatpush1.msra.mxu0 0.0
        %684 = vmatprep.subr.mxu0 0.0
        %685 = vmatpush1.msra.mxu0 0.0
        %686 = vmatprep.subr.mxu0 0.0
        %687 = vmatpush1.msra.mxu0 0.0
        %688 = vmatprep.subr.mxu0 0.0
        %689 = vmatpush1.msra.mxu0 0.0
        %690 = vmatprep.subr.mxu0 0.0
        %691 = vmatpush1.msra.mxu0 0.0
        %692 = vmatprep.subr.mxu0 0.0
        %693 = vmatpush1.msra.mxu0 0.0
        %694 = vmatprep.subr.mxu0 0.0
        %695 = vmatpush1.msra.mxu0 0.0
        %696 = vmatprep.subr.mxu0 0.0
        %697 = vmatpush1.msra.mxu0 0.0
        %698 = vmatprep.subr.mxu0 0.0
        %699 = vmatpush1.msra.mxu0 0.0
        %700 = vmatprep.subr.mxu0 0.0
        %701 = vmatpush1.msra.mxu0 0.0
        %702 = vmatprep.subr.mxu0 0.0
        %703 = vmatpush1.msra.mxu0 0.0
        %704 = vmatprep.subr.mxu0 0.0
        %705 = vmatpush1.msra.mxu0 0.0
        %706 = vmatprep.subr.mxu0 0.0
        %707 = vmatpush1.msra.mxu0 0.0
        %708 = vmatprep.subr.mxu0 0.0
        %709 = vmatpush1.msra.mxu0 0.0
        %710 = vmatprep.mubr.f32.mxu0 0.0
        %711 = vmatmul.mubr.f32.gmra.mrb[0].mxu0 %v504
        %v712 = vpop.f32.mrb[0].mxu0
        %v713 = vadd.f32 0.0, %v712
        %v714 = vpop.f32.mrb[0].mxu0
        %715 = vdwg.mxu0
        %s716 = sld [smem:[#allocation2]]
        %v717 = vstv %s716
        %v718 = vsub.f32 %v573, %v717
        %s719 = sld [smem:[#allocation5]]
        %v720 = vstv %s719
        %v721 = vmul.f32 %v718, %v720
        %vm722 = vcmask 64512
        %723 = vst.msk [vmem:[%s244] sm:$0xff] %vm722, %v721
        %s724 = sld [smem:[#allocation2 + $0x1]]
        %v725 = vstv %s724
        %v726 = vsub.f32 %v643, %v725
        %s727 = sld [smem:[#allocation5 + $0x1]]
        %v728 = vstv %s727
        %v729 = vmul.f32 %v726, %v728
        %s730 = scalar_lea.vmem %s244, 8 [#allocation7]
        %731 = vst.msk [vmem:[%s730] sm:$0xff] %vm722, %v729
        %s732 = sld [smem:[#allocation2 + $0x2]]
        %v733 = vstv %s732
        %v734 = vsub.f32 %v713, %v733
        %s735 = sld [smem:[#allocation5 + $0x2]]
        %v736 = vstv %s735
        %v737 = vmul.f32 %v734, %v736
        %s738 = scalar_lea.vmem %s244, 16 [#allocation7]
        %739 = vst.msk [vmem:[%s738] sm:$0xff] %vm722, %v737
        %s740 = sand.u32 %s139, 1
        %s741 = scalar_lea.sflag [#allocation3], %s740
        %s742 = sand.u32 %s139, 1
        %s743 = smul.addr %s742, 24
        %s744 = scalar_lea.vmem [#allocation7], %s743
        // Predicated region
        $region49: #{imagenet_eval.1} parent=39 // pred_check
          %p745 = pneg %p149
        $region50: #{imagenet_eval.1} parent=39 // pred_check_branch
          %747 = sbr.rel (%p745) target = $region52
        $region51: #{imagenet_eval.1} parent=39 // pred_region
          %s749 = ssub.s32 384, 384
          %750 = vsyncadd %s741, %s749
          %s751 = smul.addr %s21, 3
          %s752 = smul.addr %s751, 128
          %s753 = scalar_lea.hbm %s5, %s752
          %s754 = sshll.u32 %s744, 4
          %s755 = int_to_ptr.vmem [resolvable:$true] %s754
          %760 = dma.vmem_to_hbm [thread:$0]  %s755, 384, %s753, %s741, 128, 128, 8
        $region52: #{imagenet_eval.1} parent=39 // pred_fallthru
          _
      $region40: #{imagenet_eval.1} parent=5 // pred_fallthru
        _
      %p761 = scmp.le.s32.totalorder 2, %s16
      // Predicated region
      $region53: #{imagenet_eval.1} parent=5 // pred_check
        %p762 = pneg %p761
      $region54: #{imagenet_eval.1} parent=5 // pred_check_branch
        %764 = sbr.rel (%p762) target = $region56
      $region55: #{imagenet_eval.1} parent=5 // pred_region
        %s765 = ssub.s32 %s16, 2
        // Predicated region
        $region57: #{imagenet_eval.1} parent=55 // pred_check
          %p766 = pneg %p155
        $region58: #{imagenet_eval.1} parent=55 // pred_check_branch
          %768 = sbr.rel (%p766) target = $region60
        $region59: #{imagenet_eval.1} parent=55 // pred_region
          %s769 = sand.u32 %s140, 1
          %s770 = scalar_lea.sflag [#allocation3], %s769
          %s771 = sand.u32 %s140, 1
          %s772 = smul.addr %s771, 24
          %s773 = scalar_lea.vmem [#allocation7], %s772
          %774 = dma.done %s770, 384
        $region60: #{imagenet_eval.1} parent=55 // pred_fallthru
          _
      $region56: #{imagenet_eval.1} parent=5 // pred_fallthru
        _
    $region6: #{imagenet_eval.1} parent=1 // loop_footer
      %s20 = sadd.s32 1, %s16
    $region7: #{imagenet_eval.1} parent=1 // loop_footer_branch
      %15 = sbr.rel target = $region3
    $region8: #{imagenet_eval.1} parent=1 // loop_exit
      _
    %775 = vsyncpa [#allocation3], 1
    %s776 = scalar_lea.sflag [#allocation3], 1
    %777 = vsyncpa %s776, 1
    %778 = vsyncpa [#allocation4], 1
    %s779 = scalar_lea.sflag [#allocation4], 1
    %780 = vsyncpa %s779, 1
    %781 = vsyncpa [#allocation6], 1

</llo_original>
